<compile_context>
chip_gen: v7x
topology: tpu7x:2x2x1
jax: 0.10.0
libtpu: 0.0.40
codegen_flags: <defaults>
</compile_context>

<pallas_src>
import jax
import jax.numpy as jnp
from jax.experimental import pallas as pl
from jax.experimental.pallas import tpu as pltpu


def _round_up(n, m):
    return ((n + m - 1) // m) * m


def _vmem_capacity_bytes():
    try:
        return int(pltpu.get_tpu_info().vmem_capacity_bytes)
    except Exception:
        return 64 * 1024 * 1024  # conservative default (v7x physical VMEM)


def pad_embedding_table(weight):
    """Pad the feature dim to a multiple of 128 once at init (lane-dense stores)."""
    V, D = weight.shape
    d_pad = _round_up(max(D, 1), 128)
    if d_pad == D:
        return weight
    return jnp.pad(weight, ((0, 0), (0, d_pad - D)))


def _resident_gather_kernel(ids_ref, w_ref, out_ref):
    # ids_ref : (n_pad,)            int32  SMEM (scalar prefetch)
    # w_ref   : (V, d_pad)          f32    VMEM (resident: constant index_map)
    # out_ref : (block_rows, d_pad) f32    VMEM output tile (double-buffered)
    block = out_ref.shape[0]
    base = pl.program_id(0) * block
    # Unrolled per-row vector loads from the resident table: pure vld/vst work,
    # no DMA descriptors. `row` is a scalar read from SMEM (dynamic sublane
    # index on the first axis of the VMEM table is supported).
    for r in range(block):
        row = ids_ref[base + r]
        out_ref[pl.ds(r, 1), :] = w_ref[pl.ds(row, 1), :]


def _hbm_gather_kernel(ids_ref, w_hbm_ref, out_ref, sem_ref):
    # ids_ref  : (n_pad,)            int32  SMEM (scalar prefetch)
    # w_hbm_ref: (V, d_pad)          f32    HBM  (memory_space=pl.ANY)
    # out_ref  : (block_rows, d_pad) f32    VMEM output tile
    # sem_ref  : ()                  shared DMA semaphore (all rows same size)
    block = out_ref.shape[0]
    base = pl.program_id(0) * block

    # Issue all row-gather DMAs for this tile (scalar-unit work only).
    for r in range(block):
        row = ids_ref[base + r]
        pltpu.make_async_copy(
            w_hbm_ref.at[pl.ds(row, 1)],   # (1, d_pad) row of the table in HBM
            out_ref.at[pl.ds(r, 1)],       # (1, d_pad) row of the output tile
            sem_ref,
        ).start()

    # Drain: every copy is the same size and signals the same semaphore, so
    # wait `block` times with static slices only — no ids_ref reads here.
    for r in range(block):
        pltpu.make_async_copy(
            w_hbm_ref.at[pl.ds(0, 1)],
            out_ref.at[pl.ds(r, 1)],
            sem_ref,
        ).wait()


def word_embedding(x, weight, *, out_dim=None, block_rows=None, force_hbm=False):
    """Pallas equivalent of nn.Embedding forward: weight[x].

    `weight` is ideally pre-padded to a lane-multiple feature dim via
    pad_embedding_table(); pass out_dim=<original D> to slice the result.
    """
    B, S = x.shape
    V, Dw = weight.shape
    assert V >= 1, "vocab_size must be >= 1"
    if out_dim is None:
        out_dim = Dw
    N = B * S
    itemsize = jnp.dtype(weight.dtype).itemsize

    # Lane-dense feature dim. (Fallback per-call pad only; prefer padding once.)
    d_pad = _round_up(max(Dw, 1), 128)
    w = weight if d_pad == Dw else jnp.pad(weight, ((0, 0), (0, d_pad - Dw)))

    # Rows gathered per grid step: large (amortizes ~0.35us/step overhead),
    # multiple of 8, prefer a divisor of N so the token axis needs no padding.
    if block_rows is None:
        block_rows = 256
        while block_rows > 8 and N % block_rows != 0:
            block_rows //= 2
    block_rows = max(8, _round_up(block_rows, 8))
    n_pad = _round_up(N, block_rows)
    # Keep grid >= 2 when possible so both v7x TensorCores get work.
    while n_pad // block_rows < 2 and block_rows > 8:
        block_rows = max(8, _round_up(block_rows // 2, 8))
        n_pad = _round_up(N, block_rows)
    grid = (n_pad // block_rows,)

    # Flat, clamped, padded indices (padded lookups hit row 0, sliced off below).
    ids = jnp.clip(x.reshape(N).astype(jnp.int32), 0, V - 1)
    if n_pad != N:
        ids = jnp.pad(ids, (0, n_pad - N))

    # --- dispatch: VMEM-resident gather vs HBM DMA-gather fallback -----------
    table_bytes = V * d_pad * itemsize
    out_tile_bytes = block_rows * d_pad * itemsize
    capacity = _vmem_capacity_bytes()
    # Budget 2x table (input blocks may be double-buffered) + 2x2 output tiles,
    # gated at ~60% of physical VMEM (headroom for compiler scratch).
    resident_need = 2 * table_bytes + 4 * out_tile_bytes + (1 << 20)
    use_resident = (not force_hbm) and (resident_need <= int(capacity * 0.6))

    needed_vmem = (2 * table_bytes if use_resident else 0) + 4 * out_tile_bytes + (2 << 20)
    vmem_limit = int(min(capacity * 0.9, max(needed_vmem, 32 << 20)))

    bytes_accessed = int(n_pad * 4 + 2 * n_pad * d_pad * itemsize
                         + (table_bytes if use_resident else 0))

    if use_resident:
        kernel = _resident_gather_kernel
        grid_spec = pltpu.PrefetchScalarGridSpec(
            num_scalar_prefetch=1,                      # ids -> SMEM
            grid=grid,
            in_specs=[
                # Whole table resident in VMEM; constant block index -> fetched once.
                pl.BlockSpec((V, d_pad), lambda i, ids: (0, 0)),
            ],
            out_specs=pl.BlockSpec((block_rows, d_pad), lambda i, ids: (i, 0)),
        )
    else:
        kernel = _hbm_gather_kernel
        grid_spec = pltpu.PrefetchScalarGridSpec(
            num_scalar_prefetch=1,                      # ids -> SMEM
            grid=grid,
            in_specs=[
                pl.BlockSpec(memory_space=pl.ANY),      # table stays in HBM
            ],
            out_specs=pl.BlockSpec((block_rows, d_pad), lambda i, ids: (i, 0)),
            scratch_shapes=[pltpu.SemaphoreType.DMA(())],   # one shared DMA sem
        )

    out = pl.pallas_call(
        kernel,
        out_shape=jax.ShapeDtypeStruct((n_pad, d_pad), weight.dtype),
        grid_spec=grid_spec,
        compiler_params=pltpu.CompilerParams(
            dimension_semantics=("parallel",),
            vmem_limit_bytes=vmem_limit,
        ),
        cost_estimate=pl.CostEstimate(
            flops=0, transcendentals=0, bytes_accessed=bytes_accessed
        ),
    )(ids, w)

    # TODO(synk): for best perf, consume the padded (n_pad, d_pad) layout
    # downstream; the slices below are only taken when padding was needed.
    if n_pad != N:
        out = out[:N]
    if d_pad != out_dim:
        out = out[:, :out_dim]
    return out.reshape(B, S, out_dim)


if __name__ == "__main__":
    # The reference script has vocab_size = len({}) == 0, which is degenerate;
    # use a small non-empty vocab with the module's embed_dim = 100.
    vocab_size = 32
    embed_dim = 100
    batch, seq = 2, 8

    key = jax.random.PRNGKey(0)
    k_w, k_x = jax.random.split(key)

    # np.random.uniform(-0.01, 0.01, (V, D)) analogue, deterministic.
    embedding_weight = jax.random.uniform(
        k_w, (vocab_size, embed_dim), dtype=jnp.float32,
        minval=-0.01, maxval=0.01,
    )
    x = jax.random.randint(k_x, (batch, seq), 0, vocab_size, dtype=jnp.int32)

    # Pad the table once at "init" (as a real model would), not per call.
    w_padded = pad_embedding_table(embedding_weight)

    # Reference semantics of nn.Embedding forward: weight[x] (bit-exact match
    # expected — both kernel paths are byte copies of table rows).
    ref = jnp.take(embedding_weight, x, axis=0)

    # Fast path: VMEM-resident table, in-kernel vector gather (default dispatch).
    out = jax.block_until_ready(word_embedding(x, w_padded, out_dim=embed_dim))
    assert out.shape == (batch, seq, embed_dim)
    assert out.dtype == jnp.float32
    assert jnp.array_equal(out, ref), "resident-gather mismatch vs weight[x]"

    # Large-vocab fallback: per-row HBM DMA gather (forced here to cover it).
    out_hbm = jax.block_until_ready(
        word_embedding(x, w_padded, out_dim=embed_dim, force_hbm=True))
    assert jnp.array_equal(out_hbm, ref), "hbm-gather mismatch vs weight[x]"

    print("KERNEL_OK")
</pallas_src>

<mosaic_0001>
module attributes {stable_mosaic.version = 11 : i64} {
  func.func @_resident_gather_kernel(%arg0: i32, %arg1: memref<16xi32, #tpu.memory_space<smem>>, %arg2: memref<32x128xf32, #tpu.memory_space<vmem>>, %arg3: memref<8x128xf32, #tpu.memory_space<vmem>>) attributes {dimension_semantics = [#tpu.dimension_semantics<parallel>], iteration_bounds = array<i64: 2>, scalar_prefetch = 1 : i64, scratch_operands = 0 : i64, tpu.core_type = #tpu.core_type<tc>, window_params = [{pipeline_mode = #tpu.pipeline_mode<synchronous>, transform_indices = @transform_0, window_bounds = array<i64: 32, 128>}, {transform_indices = @transform_1, window_bounds = array<i64: 8, 128>}]} {
    %c8_i32 = arith.constant 8 : i32
    %0 = arith.muli %arg0, %c8_i32 : i32
    %c0_i32 = arith.constant 0 : i32
    %1 = arith.addi %0, %c0_i32 : i32
    %2 = arith.index_cast %1 : i32 to index
    %3 = memref.load %arg1[%2] : memref<16xi32, #tpu.memory_space<smem>>
    %4 = arith.index_cast %3 : i32 to index
    %c0 = arith.constant 0 : index
    %5 = vector.load %arg2[%4, %c0] : memref<32x128xf32, #tpu.memory_space<vmem>>, vector<1x128xf32>
    %c0_0 = arith.constant 0 : index
    %c0_1 = arith.constant 0 : index
    %6 = vector.load %arg3[%c0_0, %c0_1] : memref<8x128xf32, #tpu.memory_space<vmem>>, vector<1x128xf32>
    tpu.vector_store %arg3[%c0_0, %c0_1], %5 {strides = array<i32>} : memref<8x128xf32, #tpu.memory_space<vmem>>, vector<1x128xf32>,
    %c1_i32 = arith.constant 1 : i32
    %7 = arith.addi %0, %c1_i32 : i32
    %8 = arith.index_cast %7 : i32 to index
    %9 = memref.load %arg1[%8] : memref<16xi32, #tpu.memory_space<smem>>
    %10 = arith.index_cast %9 : i32 to index
    %c0_2 = arith.constant 0 : index
    %11 = vector.load %arg2[%10, %c0_2] : memref<32x128xf32, #tpu.memory_space<vmem>>, vector<1x128xf32>
    %c1 = arith.constant 1 : index
    %c0_3 = arith.constant 0 : index
    %12 = vector.load %arg3[%c1, %c0_3] : memref<8x128xf32, #tpu.memory_space<vmem>>, vector<1x128xf32>
    tpu.vector_store %arg3[%c1, %c0_3], %11 {strides = array<i32>} : memref<8x128xf32, #tpu.memory_space<vmem>>, vector<1x128xf32>,
    %c2_i32 = arith.constant 2 : i32
    %13 = arith.addi %0, %c2_i32 : i32
    %14 = arith.index_cast %13 : i32 to index
    %15 = memref.load %arg1[%14] : memref<16xi32, #tpu.memory_space<smem>>
    %16 = arith.index_cast %15 : i32 to index
    %c0_4 = arith.constant 0 : index
    %17 = vector.load %arg2[%16, %c0_4] : memref<32x128xf32, #tpu.memory_space<vmem>>, vector<1x128xf32>
    %c2 = arith.constant 2 : index
    %c0_5 = arith.constant 0 : index
    %18 = vector.load %arg3[%c2, %c0_5] : memref<8x128xf32, #tpu.memory_space<vmem>>, vector<1x128xf32>
    tpu.vector_store %arg3[%c2, %c0_5], %17 {strides = array<i32>} : memref<8x128xf32, #tpu.memory_space<vmem>>, vector<1x128xf32>,
    %c3_i32 = arith.constant 3 : i32
    %19 = arith.addi %0, %c3_i32 : i32
    %20 = arith.index_cast %19 : i32 to index
    %21 = memref.load %arg1[%20] : memref<16xi32, #tpu.memory_space<smem>>
    %22 = arith.index_cast %21 : i32 to index
    %c0_6 = arith.constant 0 : index
    %23 = vector.load %arg2[%22, %c0_6] : memref<32x128xf32, #tpu.memory_space<vmem>>, vector<1x128xf32>
    %c3 = arith.constant 3 : index
    %c0_7 = arith.constant 0 : index
    %24 = vector.load %arg3[%c3, %c0_7] : memref<8x128xf32, #tpu.memory_space<vmem>>, vector<1x128xf32>
    tpu.vector_store %arg3[%c3, %c0_7], %23 {strides = array<i32>} : memref<8x128xf32, #tpu.memory_space<vmem>>, vector<1x128xf32>,
    %c4_i32 = arith.constant 4 : i32
    %25 = arith.addi %0, %c4_i32 : i32
    %26 = arith.index_cast %25 : i32 to index
    %27 = memref.load %arg1[%26] : memref<16xi32, #tpu.memory_space<smem>>
    %28 = arith.index_cast %27 : i32 to index
    %c0_8 = arith.constant 0 : index
    %29 = vector.load %arg2[%28, %c0_8] : memref<32x128xf32, #tpu.memory_space<vmem>>, vector<1x128xf32>
    %c4 = arith.constant 4 : index
    %c0_9 = arith.constant 0 : index
    %30 = vector.load %arg3[%c4, %c0_9] : memref<8x128xf32, #tpu.memory_space<vmem>>, vector<1x128xf32>
    tpu.vector_store %arg3[%c4, %c0_9], %29 {strides = array<i32>} : memref<8x128xf32, #tpu.memory_space<vmem>>, vector<1x128xf32>,
    %c5_i32 = arith.constant 5 : i32
    %31 = arith.addi %0, %c5_i32 : i32
    %32 = arith.index_cast %31 : i32 to index
    %33 = memref.load %arg1[%32] : memref<16xi32, #tpu.memory_space<smem>>
    %34 = arith.index_cast %33 : i32 to index
    %c0_10 = arith.constant 0 : index
    %35 = vector.load %arg2[%34, %c0_10] : memref<32x128xf32, #tpu.memory_space<vmem>>, vector<1x128xf32>
    %c5 = arith.constant 5 : index
    %c0_11 = arith.constant 0 : index
    %36 = vector.load %arg3[%c5, %c0_11] : memref<8x128xf32, #tpu.memory_space<vmem>>, vector<1x128xf32>
    tpu.vector_store %arg3[%c5, %c0_11], %35 {strides = array<i32>} : memref<8x128xf32, #tpu.memory_space<vmem>>, vector<1x128xf32>,
    %c6_i32 = arith.constant 6 : i32
    %37 = arith.addi %0, %c6_i32 : i32
    %38 = arith.index_cast %37 : i32 to index
    %39 = memref.load %arg1[%38] : memref<16xi32, #tpu.memory_space<smem>>
    %40 = arith.index_cast %39 : i32 to index
    %c0_12 = arith.constant 0 : index
    %41 = vector.load %arg2[%40, %c0_12] : memref<32x128xf32, #tpu.memory_space<vmem>>, vector<1x128xf32>
    %c6 = arith.constant 6 : index
    %c0_13 = arith.constant 0 : index
    %42 = vector.load %arg3[%c6, %c0_13] : memref<8x128xf32, #tpu.memory_space<vmem>>, vector<1x128xf32>
    tpu.vector_store %arg3[%c6, %c0_13], %41 {strides = array<i32>} : memref<8x128xf32, #tpu.memory_space<vmem>>, vector<1x128xf32>,
    %c7_i32 = arith.constant 7 : i32
    %43 = arith.addi %0, %c7_i32 : i32
    %44 = arith.index_cast %43 : i32 to index
    %45 = memref.load %arg1[%44] : memref<16xi32, #tpu.memory_space<smem>>
    %46 = arith.index_cast %45 : i32 to index
    %c0_14 = arith.constant 0 : index
    %47 = vector.load %arg2[%46, %c0_14] : memref<32x128xf32, #tpu.memory_space<vmem>>, vector<1x128xf32>
    %c7 = arith.constant 7 : index
    %c0_15 = arith.constant 0 : index
    %48 = vector.load %arg3[%c7, %c0_15] : memref<8x128xf32, #tpu.memory_space<vmem>>, vector<1x128xf32>
    tpu.vector_store %arg3[%c7, %c0_15], %47 {strides = array<i32>} : memref<8x128xf32, #tpu.memory_space<vmem>>, vector<1x128xf32>,
    return
  }
  func.func @transform_0(%arg0: i32, %arg1: memref<16xi32, #tpu.memory_space<smem>>) -> (i32, i32) {
    %c0_i32 = arith.constant 0 : i32
    %c0_i32_0 = arith.constant 0 : i32
    %c0_i32_1 = arith.constant 0 : i32
    return %c0_i32, %c0_i32_0 : i32, i32
  }
  func.func @transform_1(%arg0: i32, %arg1: memref<16xi32, #tpu.memory_space<smem>>) -> (i32, i32) {
    %c0_i32 = arith.constant 0 : i32
    %c0_i32_0 = arith.constant 0 : i32
    return %arg0, %c0_i32 : i32, i32
  }
}

</mosaic_0001>

<llo_original>
// kernel: tpu_custom_call.1
$region0: #{tpu_custom_call.1}
  #allocation0 [shape = 'u32[]', space=smem, size = 0x4, offset = 0x4, fixed_abs, tag = 'smem constant byte address 0x4 - core index']
  #allocation1 [shape = 'u32[144,128]{1,0:T(1,128)}', space=vmem, size = 0x12000, scoped, tag = 'internal scratch']
  #allocation2 [shape = 's32[1]{0}', space=sflag, size = 0x4, scoped, tag = 'scoped memory for tpu_custom_call.1']
  #allocation3 [shape = 'u8[512]{0}', space=smem, size = 0x200, scoped, tag = 'prefetched SMEM operand 0']
  %s0 = inlined_call_operand.hbm [shape: s32[16], index: 0, kind: input, shape index: {}]
  %s1 = inlined_call_operand.hbm [shape: f32[32,128], index: 1, kind: input, shape index: {}]
  %s2 = inlined_call_operand.hbm [shape: f32[16,128], index: 2, kind: output, shape index: {}]
  %s3 = sld [smem:[#allocation0]]
  $region41: #{tpu_custom_call.1} parent=0
    _
  %s5 = ssub.s32 1, %s3
  %s6 = scalar_select 0, %s5, %s3
  %8 = dma.hbm_to_smem %s0, 16, [#allocation3], [#allocation2]
  %9 = dma.done [#allocation2], 16
  %10 = sfence
  $region1: #{tpu_custom_call.1} parent=0
    #allocation4 [shape = 'u8[16384]{0}', space=vmem, size = 0x4000, scoped, tag = 'input window, operand 1, single buffered']
    #allocation5 [shape = 's32[2]{0}', space=sflag, size = 0x8, scoped, tag = 'scoped memory for tpu_custom_call.1']
    #allocation6 [shape = 's32[2]{0}', space=sflag, size = 0x8, scoped, tag = 'scoped memory for tpu_custom_call.1']
    #allocation7 [shape = 'u8[8192]{0}', space=vmem, size = 0x2000, scoped, tag = 'output window, operand 0']
    %11 = vsyncpa [#allocation5], 0
    %12 = vsyncpa [#allocation6], 0
    %s13 = scalar_lea.sflag [#allocation6], 1
    %14 = vsyncpa %s13, 0
    loop: start=0, step=1, limit=4
    $region2: #{tpu_custom_call.1} parent=1 // loop_pre_header
      _
    $region3: #{tpu_custom_call.1} parent=1 // loop_header
      %s16 = sphi 0, %s20
      %p17 = scmp.ge.s32.totalorder %s16, 4
      %s24 = sphi 0, %s24
      %s26 = sphi 0, %s24
      %s27 = sphi 0, %s26
      %s41 = sphi 0, %s27
      %s47 = sphi 0, %s49
      %s50 = sphi 0, %s47
      %s51 = sphi 0, %s50
      %s67 = sphi 0, %s51
    $region4: #{tpu_custom_call.1} parent=1 // loop_header_branch
      %19 = sbr.rel (%p17) target = $region8
    $region5: #{tpu_custom_call.1} parent=1 // loop_body
      %s21 = ssub.s32 %s16, 1
      %s22 = ssub.s32 %s16, 2
      %s23 = sadd.s32 %s16, 1
      %s25 = sadd.s32 %s24, 1
      %p28 = scmp.eq.s32.totalorder %s16, 1
      %p29 = scmp.ne.s32.totalorder %s24, %s26
      %p30 = scmp.eq.s32.totalorder %s16, 0
      %p31 = por %p29, %p30
      %p32 = scmp.ne.s32.totalorder %s24, %s26
      %p33 = scmp.eq.s32.totalorder %s21, 1
      %p34 = por %p32, %p33
      %p35 = scmp.ne.s32.totalorder %s26, %s27
      %p36 = scmp.eq.s32.totalorder %s21, 0
      %p37 = por %p35, %p36
      %p38 = scmp.ne.s32.totalorder %s26, %s27
      %p39 = scmp.eq.s32.totalorder %s22, 1
      %p40 = por %p38, %p39
      %p42 = scmp.ne.s32.totalorder %s27, %s41
      %p43 = scmp.eq.s32.totalorder %s22, 0
      %p44 = por %p42, %p43
      %s45 = ssub.s32 %s16, %s23
      %p46 = scmp.eq.s32.totalorder %s45, 0
      %s48 = sadd.s32 %s47, 1
      %s49 = scalar_select %p46, %s47, %s48
      %p52 = pneg %p46
      %p53 = scmp.eq.s32.totalorder %s16, 1
      %p54 = por %p52, %p53
      %p55 = scmp.ne.s32.totalorder %s47, %s50
      %p56 = scmp.eq.s32.totalorder %s16, 0
      %p57 = por %p55, %p56
      %p58 = scmp.ne.s32.totalorder %s47, %s50
      %p59 = scmp.eq.s32.totalorder %s21, 1
      %p60 = por %p58, %p59
      %p61 = scmp.ne.s32.totalorder %s50, %s51
      %p62 = scmp.eq.s32.totalorder %s21, 0
      %p63 = por %p61, %p62
      %p64 = scmp.ne.s32.totalorder %s50, %s51
      %p65 = scmp.eq.s32.totalorder %s22, 1
      %p66 = por %p64, %p65
      %p68 = scmp.ne.s32.totalorder %s51, %s67
      %p69 = scmp.eq.s32.totalorder %s22, 0
      %p70 = por %p68, %p69
      %p71 = scmp.le.s32.totalorder 1, %s16
      %p72 = scmp.lt.s32.totalorder %s16, 3
      %p73 = pnand %p71, %p72
      %p74 = pneg %p73
      // Predicated region
      $region9: #{tpu_custom_call.1} parent=5 // pred_check
        _
      $region10: #{tpu_custom_call.1} parent=5 // pred_check_branch
        %76 = sbr.rel (%p73) target = $region12
      $region11: #{tpu_custom_call.1} parent=5 // pred_region
        %s77 = ssub.s32 %s16, 1
        // Predicated region
        $region13: #{tpu_custom_call.1} parent=11 // pred_check
          %p78 = pneg %p37
        $region14: #{tpu_custom_call.1} parent=11 // pred_check_branch
          %80 = sbr.rel (%p78) target = $region16
        $region15: #{tpu_custom_call.1} parent=11 // pred_region
          %s82 = ssub.s32 512, 512
          %83 = vsyncadd [#allocation5], %s82
          %s84 = sshll.u32 [#allocation4], 4
          %s85 = int_to_ptr.vmem [resolvable:$true] %s84
          %90 = dma.hbm_to_vmem [thread:$0]  %s1, 512, %s85, [#allocation5], 128, 128, 8
        $region16: #{tpu_custom_call.1} parent=11 // pred_fallthru
          _
      $region12: #{tpu_custom_call.1} parent=5 // pred_fallthru
        _
      %p91 = scmp.lt.s32.totalorder %s16, 2
      // Predicated region
      $region17: #{tpu_custom_call.1} parent=5 // pred_check
        %p92 = pneg %p91
      $region18: #{tpu_custom_call.1} parent=5 // pred_check_branch
        %94 = sbr.rel (%p92) target = $region20
      $region19: #{tpu_custom_call.1} parent=5 // pred_region
        _
      $region20: #{tpu_custom_call.1} parent=5 // pred_fallthru
        _
      %p95 = scmp.le.s32.totalorder 1, %s16
      %p96 = scmp.lt.s32.totalorder %s16, 3
      %p97 = pnand %p95, %p96
      %p98 = pneg %p97
      // Predicated region
      $region21: #{tpu_custom_call.1} parent=5 // pred_check
        _
      $region22: #{tpu_custom_call.1} parent=5 // pred_check_branch
        %100 = sbr.rel (%p97) target = $region24
      $region23: #{tpu_custom_call.1} parent=5 // pred_region
        %s101 = ssub.s32 %s16, 1
        // Predicated region
        $region25: #{tpu_custom_call.1} parent=23 // pred_check
          %p102 = pneg %p37
        $region26: #{tpu_custom_call.1} parent=23 // pred_check_branch
          %104 = sbr.rel (%p102) target = $region28
        $region27: #{tpu_custom_call.1} parent=23 // pred_region
          %105 = dma.done [#allocation5], 512
        $region28: #{tpu_custom_call.1} parent=23 // pred_fallthru
          _
        %p106 = pneg %p37
        %p107 = pneg %p34
        %p108 = pneg %p63
        %p109 = pneg %p60
        %s110 = sand.u32 %s50, 1
        %s111 = scalar_lea.sflag [#allocation6], %s110
        %s112 = sand.u32 %s50, 1
        %s113 = smul.addr %s112, 8
        %s114 = scalar_lea.vmem [#allocation7], %s113
        %s115 = smul.u32 %s21, 8
        %s116 = sld [smem:[#allocation3 + %s115]]
        %s117 = scalar_lea.vmem [#allocation4], %s116
        %v118 = vld [vmem:[%s117] sm:$0x1]
        %119 = vst [vmem:[%s114] sm:$0x1] %v118
        %s120 = sadd.s32 %s115, 1
        %s121 = sld [smem:[#allocation3 + %s120]]
        %s122 = scalar_lea.vmem [#allocation4], %s121
        %v123 = vld [vmem:[%s122] sm:$0x1]
        %124 = vst [vmem:[%s114 + $0x1] sm:$0x1] %v123
        %s125 = sadd.s32 %s115, 2
        %s126 = sld [smem:[#allocation3 + %s125]]
        %s127 = scalar_lea.vmem [#allocation4], %s126
        %v128 = vld [vmem:[%s127] sm:$0x1]
        %129 = vst [vmem:[%s114 + $0x2] sm:$0x1] %v128
        %s130 = sadd.s32 %s115, 3
        %s131 = sld [smem:[#allocation3 + %s130]]
        %s132 = scalar_lea.vmem [#allocation4], %s131
        %v133 = vld [vmem:[%s132] sm:$0x1]
        %134 = vst [vmem:[%s114 + $0x3] sm:$0x1] %v133
        %s135 = sadd.s32 %s115, 4
        %s136 = sld [smem:[#allocation3 + %s135]]
        %s137 = scalar_lea.vmem [#allocation4], %s136
        %v138 = vld [vmem:[%s137] sm:$0x1]
        %139 = vst [vmem:[%s114 + $0x4] sm:$0x1] %v138
        %s140 = sadd.s32 %s115, 5
        %s141 = sld [smem:[#allocation3 + %s140]]
        %s142 = scalar_lea.vmem [#allocation4], %s141
        %v143 = vld [vmem:[%s142] sm:$0x1]
        %144 = vst [vmem:[%s114 + $0x5] sm:$0x1] %v143
        %s145 = sadd.s32 %s115, 6
        %s146 = sld [smem:[#allocation3 + %s145]]
        %s147 = scalar_lea.vmem [#allocation4], %s146
        %v148 = vld [vmem:[%s147] sm:$0x1]
        %149 = vst [vmem:[%s114 + $0x6] sm:$0x1] %v148
        %s150 = sadd.s32 %s115, 7
        %s151 = sld [smem:[#allocation3 + %s150]]
        %s152 = scalar_lea.vmem [#allocation4], %s151
        %v153 = vld [vmem:[%s152] sm:$0x1]
        %154 = vst [vmem:[%s114 + $0x7] sm:$0x1] %v153
        %s155 = sand.u32 %s50, 1
        %s156 = scalar_lea.sflag [#allocation6], %s155
        %s157 = sand.u32 %s50, 1
        %s158 = smul.addr %s157, 8
        %s159 = scalar_lea.vmem [#allocation7], %s158
        // Predicated region
        $region29: #{tpu_custom_call.1} parent=23 // pred_check
          %p160 = pneg %p60
        $region30: #{tpu_custom_call.1} parent=23 // pred_check_branch
          %162 = sbr.rel (%p160) target = $region32
        $region31: #{tpu_custom_call.1} parent=23 // pred_region
          %s164 = ssub.s32 128, 128
          %165 = vsyncadd %s156, %s164
          %s166 = smul.addr %s21, 128
          %s167 = scalar_lea.hbm %s2, %s166
          %s169 = sshll.u32 %s159, 4
          %s170 = int_to_ptr.vmem [resolvable:$true] %s169
          %172 = dma.vmem_to_hbm [thread:$0]  %s170, 128, %s167, %s156
        $region32: #{tpu_custom_call.1} parent=23 // pred_fallthru
          _
      $region24: #{tpu_custom_call.1} parent=5 // pred_fallthru
        _
      %p173 = scmp.le.s32.totalorder 2, %s16
      // Predicated region
      $region33: #{tpu_custom_call.1} parent=5 // pred_check
        %p174 = pneg %p173
      $region34: #{tpu_custom_call.1} parent=5 // pred_check_branch
        %176 = sbr.rel (%p174) target = $region36
      $region35: #{tpu_custom_call.1} parent=5 // pred_region
        %s177 = ssub.s32 %s16, 2
        // Predicated region
        $region37: #{tpu_custom_call.1} parent=35 // pred_check
          %p178 = pneg %p66
        $region38: #{tpu_custom_call.1} parent=35 // pred_check_branch
          %180 = sbr.rel (%p178) target = $region40
        $region39: #{tpu_custom_call.1} parent=35 // pred_region
          %s181 = sand.u32 %s51, 1
          %s182 = scalar_lea.sflag [#allocation6], %s181
          %s183 = sand.u32 %s51, 1
          %s184 = smul.addr %s183, 8
          %s185 = scalar_lea.vmem [#allocation7], %s184
          %186 = dma.done %s182, 128
        $region40: #{tpu_custom_call.1} parent=35 // pred_fallthru
          _
      $region36: #{tpu_custom_call.1} parent=5 // pred_fallthru
        _
    $region6: #{tpu_custom_call.1} parent=1 // loop_footer
      %s20 = sadd.s32 1, %s16
    $region7: #{tpu_custom_call.1} parent=1 // loop_footer_branch
      %15 = sbr.rel target = $region3
    $region8: #{tpu_custom_call.1} parent=1 // loop_exit
      _
    %187 = vsyncpa [#allocation5], 1
    %s188 = scalar_lea.sflag [#allocation5], 1
    %189 = vsyncpa %s188, 1
    %190 = vsyncpa [#allocation6], 1
    %s191 = scalar_lea.sflag [#allocation6], 1
    %192 = vsyncpa %s191, 1

</llo_original>
